<compile_context>
chip_gen: v7x
topology: tpu7x:2x2x1
jax: 0.10.0
libtpu: 0.0.40
codegen_flags: <defaults>
</compile_context>

<pallas_src>
import jax
import jax.numpy as jnp
from jax.experimental import pallas as pl
from jax.experimental.pallas import tpu as pltpu


_LANE = 128       # lane width: hidden/output feature dims padded to this
_SUBLANE = 8      # f32 sublane height: batch tile rounded to this
_DEFAULT_VMEM_CAPACITY = 64 * 1024 * 1024   # conservative fallback (v7x per-TC)


def _round_up(n: int, m: int) -> int:
    return ((n + m - 1) // m) * m


def _vmem_capacity_bytes() -> int:
    try:
        cap = getattr(pltpu.get_tpu_info(), "vmem_capacity_bytes", None)
        if cap:
            return int(cap)
    except Exception:
        pass
    return _DEFAULT_VMEM_CAPACITY


def _sigmoid(x):
    # Shared by kernel and references (jnp.exp lowers to the EUP in Mosaic).
    return 1.0 / (1.0 + jnp.exp(-x))


def _make_mlp_kernel(n_layers: int, compute_dtype):
    """Fused-MLP kernel body for a static number of layers.

    Ref layout: (x_ref, w0, b0, w1, b1, ..., w_{L-1}, b_{L-1}, o_ref).
    w_i: zero-padded, pre-transposed weight (in_p, out_p) in `compute_dtype`;
    b_i: zero-padded bias row (1, out_p) in f32.
    """
    def kernel(*refs):
        x_ref = refs[0]
        o_ref = refs[-1]
        params = refs[1:-1]
        act = x_ref[...].astype(jnp.float32)
        for i in range(n_layers):                      # static unrolled layer loop
            w_ref = params[2 * i]
            b_ref = params[2 * i + 1]
            # MXU matmul: bf16 x bf16 -> f32 accumulation; bias add on VPU (f32).
            act = jnp.dot(act.astype(compute_dtype), w_ref[...],
                          preferred_element_type=jnp.float32)
            act = act + b_ref[...]
            if i < n_layers - 1:
                act = _sigmoid(act)                    # EUP transcendental, fused
        o_ref[...] = act.astype(o_ref.dtype)
    return kernel


class PallasNeuralNet:
    """Mirror of TorchNeuralNet.forward as ONE fused, batch-gridded Pallas kernel."""

    def __init__(self, layers, key, *, max_tile_b=256, compute_dtype=jnp.bfloat16):
        self.layer_sizes = list(layers)
        self.max_tile_b = int(max_tile_b)
        self.compute_dtype = compute_dtype

        self.weights = []   # PyTorch-convention (out, in), f32 masters (for refs)
        self.biases = []    # (out,)
        self.w_pad = []     # padded + transposed (in_p, out_p), compute_dtype
        self.b_pad = []     # padded (1, out_p), f32

        for i in range(1, len(layers)):
            fan_in, fan_out = layers[i - 1], layers[i]
            key, wk, bk = jax.random.split(key, 3)
            bound = 1.0 / float(fan_in) ** 0.5
            w = jax.random.uniform(wk, (fan_out, fan_in), jnp.float32,
                                   minval=-bound, maxval=bound)
            b = jax.random.uniform(bk, (fan_out,), jnp.float32,
                                   minval=-bound, maxval=bound)
            self.weights.append(w)
            self.biases.append(b)

            # First layer keeps its true input width so the wrapper never has to
            # materialize a feature-padded copy of x.  Hidden/output widths are
            # padded to 128 for lane-dense MXU tiles and unmasked stores.
            in_p = fan_in if i == 1 else _round_up(fan_in, _LANE)
            out_p = _round_up(fan_out, _LANE)
            w_t_pad = jnp.zeros((in_p, out_p), jnp.float32).at[:fan_in, :fan_out].set(w.T)
            self.w_pad.append(w_t_pad.astype(compute_dtype))
            self.b_pad.append(jnp.zeros((1, out_p), jnp.float32).at[:, :fan_out].set(b))

        n_layers = len(self.w_pad)
        w_pad = tuple(self.w_pad)
        b_pad = tuple(self.b_pad)
        in0 = self.layer_sizes[0]
        out_last = self.layer_sizes[-1]
        out_p_last = w_pad[-1].shape[1]
        kernel = _make_mlp_kernel(n_layers, compute_dtype)
        max_tile_b = self.max_tile_b

        flat_params = []
        param_specs = []
        for w, b in zip(w_pad, b_pad):
            flat_params.extend((w, b))
            # Constant index map -> fetched once, resident across all batch tiles.
            param_specs.append(pl.BlockSpec(w.shape, lambda i: (0, 0)))
            param_specs.append(pl.BlockSpec(b.shape, lambda i: (0, 0)))
        flat_params = tuple(flat_params)

        param_bytes = sum(int(p.size) * p.dtype.itemsize for p in flat_params)
        max_act_w = max(int(w.shape[1]) for w in w_pad)
        vmem_capacity = _vmem_capacity_bytes()

        def _fwd(x):
            B = x.shape[0]
            tile_b = min(max_tile_b, _round_up(B, _SUBLANE))
            b_total = _round_up(B, tile_b)
            x = x.astype(jnp.float32)
            if b_total != B:
                x = jnp.pad(x, ((0, b_total - B), (0, 0)))
            grid = (b_total // tile_b,)

            # Generation-aware VMEM budget: 2x params (possible double buffers),
            # double-buffered x/out tiles, ~2 live activations, 1 MiB margin.
            needed = (2 * param_bytes
                      + 2 * tile_b * (in0 + out_p_last) * 4
                      + 2 * tile_b * max_act_w * 4
                      + (1 << 20))
            if needed > int(0.9 * vmem_capacity):
                # TODO(synk): add a K/N-tiled grid path (f32 accumulator scratch,
                # "arbitrary" reduction axis) for layer widths exceeding VMEM.
                raise NotImplementedError(
                    "MLP too large for the fused single-VMEM-resident kernel")
            vmem_limit = int(min(0.9 * vmem_capacity, max(needed, 32 << 20)))

            out_padded = pl.pallas_call(
                kernel,
                out_shape=jax.ShapeDtypeStruct((b_total, out_p_last), jnp.float32),
                grid=grid,
                in_specs=[pl.BlockSpec((tile_b, in0), lambda i: (i, 0))]
                         + param_specs,
                out_specs=pl.BlockSpec((tile_b, out_p_last), lambda i: (i, 0)),
                compiler_params=pltpu.CompilerParams(
                    dimension_semantics=("parallel",),   # megacore on v7x
                    vmem_limit_bytes=vmem_limit),
            )(x, *flat_params)
            return out_padded[:B, :out_last]

        self._fwd = jax.jit(_fwd)

    def forward(self, x):
        return self._fwd(x)

    # Pure-f32 reference (original PyTorch semantics).
    def forward_ref(self, x):
        n = len(self.weights)
        act = x.astype(jnp.float32)
        for i, (w, b) in enumerate(zip(self.weights, self.biases)):
            act = jnp.matmul(act, w.T, precision=jax.lax.Precision.HIGHEST) + b
            if i < n - 1:
                act = _sigmoid(act)
        return act

    # Reference matching the kernel's mixed precision exactly (bf16 operands,
    # f32 products/accumulation) -> tight-tolerance validation of the kernel.
    def forward_matched_ref(self, x):
        n = len(self.weights)
        cd = self.compute_dtype
        act = x.astype(jnp.float32)
        for i, (w, b) in enumerate(zip(self.weights, self.biases)):
            a = act.astype(cd).astype(jnp.float32)
            wt = w.T.astype(cd).astype(jnp.float32)
            act = jnp.matmul(a, wt, precision=jax.lax.Precision.HIGHEST) + b
            if i < n - 1:
                act = _sigmoid(act)
        return act


if __name__ == "__main__":
    key = jax.random.PRNGKey(0)
    key, xk, pk = jax.random.split(key, 3)

    # Small MLP: 32 -> 64 -> 64 -> 16.  max_tile_b=16 so the second case below
    # actually exercises a multi-tile batch grid at small shapes.
    layer_sizes = [32, 64, 64, 16]
    net = PallasNeuralNet(layer_sizes, pk, max_tile_b=16)

    # Case 1: batch smaller than one tile (6 -> padded to 8, grid = 1).
    x_small = jax.random.normal(xk, (6, layer_sizes[0]), jnp.float32)
    out_small = jax.block_until_ready(net.forward(x_small))
    assert out_small.shape == (6, layer_sizes[-1])
    ref_small = net.forward_matched_ref(x_small)
    assert jnp.allclose(out_small, ref_small, atol=1e-4, rtol=1e-4), \
        "mismatch vs matched-precision reference (small batch)"

    # Case 2: multi-tile grid with batch padding (40 -> 48 = 3 tiles of 16).
    key, xk2 = jax.random.split(key)
    x_big = jax.random.normal(xk2, (40, layer_sizes[0]), jnp.float32)
    out_big = jax.block_until_ready(net.forward(x_big))
    assert out_big.shape == (40, layer_sizes[-1])
    ref_big = net.forward_matched_ref(x_big)
    assert jnp.allclose(out_big, ref_big, atol=1e-4, rtol=1e-4), \
        "mismatch vs matched-precision reference (gridded batch)"
    ref_f32 = net.forward_ref(x_big)
    assert jnp.allclose(out_big, ref_f32, atol=5e-2, rtol=5e-2), \
        "bf16 kernel drifted too far from the f32 reference"

    print("KERNEL_OK")
</pallas_src>

<mosaic_0001>
module attributes {stable_mosaic.version = 11 : i64} {
  func.func @kernel(%arg0: i32, %arg1: memref<8x32xf32, #tpu.memory_space<vmem>>, %arg2: memref<32x128xbf16, #tpu.memory_space<vmem>>, %arg3: memref<1x128xf32, #tpu.memory_space<vmem>>, %arg4: memref<128x128xbf16, #tpu.memory_space<vmem>>, %arg5: memref<1x128xf32, #tpu.memory_space<vmem>>, %arg6: memref<128x128xbf16, #tpu.memory_space<vmem>>, %arg7: memref<1x128xf32, #tpu.memory_space<vmem>>, %arg8: memref<8x128xf32, #tpu.memory_space<vmem>>) attributes {dimension_semantics = [#tpu.dimension_semantics<parallel>], iteration_bounds = array<i64: 1>, scalar_prefetch = 0 : i64, scratch_operands = 0 : i64, tpu.core_type = #tpu.core_type<tc>, window_params = [{transform_indices = @transform_0, window_bounds = array<i64: 8, 32>}, {pipeline_mode = #tpu.pipeline_mode<synchronous>, transform_indices = @transform_1, window_bounds = array<i64: 32, 128>}, {pipeline_mode = #tpu.pipeline_mode<synchronous>, transform_indices = @transform_2, window_bounds = array<i64: 1, 128>}, {pipeline_mode = #tpu.pipeline_mode<synchronous>, transform_indices = @transform_3, window_bounds = array<i64: 128, 128>}, {pipeline_mode = #tpu.pipeline_mode<synchronous>, transform_indices = @transform_4, window_bounds = array<i64: 1, 128>}, {pipeline_mode = #tpu.pipeline_mode<synchronous>, transform_indices = @transform_5, window_bounds = array<i64: 128, 128>}, {pipeline_mode = #tpu.pipeline_mode<synchronous>, transform_indices = @transform_6, window_bounds = array<i64: 1, 128>}, {transform_indices = @transform_7, window_bounds = array<i64: 8, 128>}]} {
    %c0 = arith.constant 0 : index
    %c0_0 = arith.constant 0 : index
    %0 = vector.load %arg1[%c0, %c0_0] : memref<8x32xf32, #tpu.memory_space<vmem>>, vector<8x32xf32>
    %1 = arith.truncf %0 : vector<8x32xf32> to vector<8x32xbf16>
    %c0_1 = arith.constant 0 : index
    %c0_2 = arith.constant 0 : index
    %2 = vector.load %arg2[%c0_1, %c0_2] : memref<32x128xbf16, #tpu.memory_space<vmem>>, vector<32x128xbf16>
    %cst = arith.constant dense<0.000000e+00> : vector<8x128xf32>
    %3 = tpu.matmul %1, %2, %cst {dimension_numbers = #tpu.dot_dimension_numbers<[1], [0], [0], [1], [0, 0, 1, 1], [], []>} : vector<8x32xbf16>, vector<32x128xbf16>, vector<8x128xf32> -> vector<8x128xf32>
    %c0_3 = arith.constant 0 : index
    %c0_4 = arith.constant 0 : index
    %4 = vector.load %arg3[%c0_3, %c0_4] : memref<1x128xf32, #tpu.memory_space<vmem>>, vector<1x128xf32>
    %5 = vector.broadcast %4 : vector<1x128xf32> to vector<8x128xf32>
    %6 = arith.addf %3, %5 : vector<8x128xf32>
    %cst_5 = arith.constant 0.000000e+00 : f32
    %7 = vector.broadcast %cst_5 : f32 to vector<8x128xf32>
    %8 = arith.subf %7, %6 : vector<8x128xf32>
    %9 = math.exp %8 : vector<8x128xf32>
    %cst_6 = arith.constant 1.000000e+00 : f32
    %10 = vector.broadcast %cst_6 : f32 to vector<8x128xf32>
    %11 = arith.addf %10, %9 : vector<8x128xf32>
    %cst_7 = arith.constant 1.000000e+00 : f32
    %12 = vector.broadcast %cst_7 : f32 to vector<8x128xf32>
    %13 = arith.divf %12, %11 : vector<8x128xf32>
    %14 = arith.truncf %13 : vector<8x128xf32> to vector<8x128xbf16>
    %c0_8 = arith.constant 0 : index
    %c0_9 = arith.constant 0 : index
    %15 = vector.load %arg4[%c0_8, %c0_9] : memref<128x128xbf16, #tpu.memory_space<vmem>>, vector<128x128xbf16>
    %cst_10 = arith.constant dense<0.000000e+00> : vector<8x128xf32>
    %16 = tpu.matmul %14, %15, %cst_10 {dimension_numbers = #tpu.dot_dimension_numbers<[1], [0], [0], [1], [0, 0, 1, 1], [], []>} : vector<8x128xbf16>, vector<128x128xbf16>, vector<8x128xf32> -> vector<8x128xf32>
    %c0_11 = arith.constant 0 : index
    %c0_12 = arith.constant 0 : index
    %17 = vector.load %arg5[%c0_11, %c0_12] : memref<1x128xf32, #tpu.memory_space<vmem>>, vector<1x128xf32>
    %18 = vector.broadcast %17 : vector<1x128xf32> to vector<8x128xf32>
    %19 = arith.addf %16, %18 : vector<8x128xf32>
    %cst_13 = arith.constant 0.000000e+00 : f32
    %20 = vector.broadcast %cst_13 : f32 to vector<8x128xf32>
    %21 = arith.subf %20, %19 : vector<8x128xf32>
    %22 = math.exp %21 : vector<8x128xf32>
    %cst_14 = arith.constant 1.000000e+00 : f32
    %23 = vector.broadcast %cst_14 : f32 to vector<8x128xf32>
    %24 = arith.addf %23, %22 : vector<8x128xf32>
    %cst_15 = arith.constant 1.000000e+00 : f32
    %25 = vector.broadcast %cst_15 : f32 to vector<8x128xf32>
    %26 = arith.divf %25, %24 : vector<8x128xf32>
    %27 = arith.truncf %26 : vector<8x128xf32> to vector<8x128xbf16>
    %c0_16 = arith.constant 0 : index
    %c0_17 = arith.constant 0 : index
    %28 = vector.load %arg6[%c0_16, %c0_17] : memref<128x128xbf16, #tpu.memory_space<vmem>>, vector<128x128xbf16>
    %cst_18 = arith.constant dense<0.000000e+00> : vector<8x128xf32>
    %29 = tpu.matmul %27, %28, %cst_18 {dimension_numbers = #tpu.dot_dimension_numbers<[1], [0], [0], [1], [0, 0, 1, 1], [], []>} : vector<8x128xbf16>, vector<128x128xbf16>, vector<8x128xf32> -> vector<8x128xf32>
    %c0_19 = arith.constant 0 : index
    %c0_20 = arith.constant 0 : index
    %30 = vector.load %arg7[%c0_19, %c0_20] : memref<1x128xf32, #tpu.memory_space<vmem>>, vector<1x128xf32>
    %31 = vector.broadcast %30 : vector<1x128xf32> to vector<8x128xf32>
    %32 = arith.addf %29, %31 : vector<8x128xf32>
    %c0_21 = arith.constant 0 : index
    %c0_22 = arith.constant 0 : index
    %33 = vector.load %arg8[%c0_21, %c0_22] : memref<8x128xf32, #tpu.memory_space<vmem>>, vector<8x128xf32>
    tpu.vector_store %arg8[%c0_21, %c0_22], %32 {strides = array<i32>} : memref<8x128xf32, #tpu.memory_space<vmem>>, vector<8x128xf32>,
    return
  }
  func.func @transform_0(%arg0: i32) -> (i32, i32) {
    %c0_i32 = arith.constant 0 : i32
    %c0_i32_0 = arith.constant 0 : i32
    return %arg0, %c0_i32 : i32, i32
  }
  func.func @transform_1(%arg0: i32) -> (i32, i32) {
    %c0_i32 = arith.constant 0 : i32
    %c0_i32_0 = arith.constant 0 : i32
    %c0_i32_1 = arith.constant 0 : i32
    return %c0_i32, %c0_i32_0 : i32, i32
  }
  func.func @transform_2(%arg0: i32) -> (i32, i32) {
    %c0_i32 = arith.constant 0 : i32
    %c0_i32_0 = arith.constant 0 : i32
    %c0_i32_1 = arith.constant 0 : i32
    return %c0_i32, %c0_i32_0 : i32, i32
  }
  func.func @transform_3(%arg0: i32) -> (i32, i32) {
    %c0_i32 = arith.constant 0 : i32
    %c0_i32_0 = arith.constant 0 : i32
    %c0_i32_1 = arith.constant 0 : i32
    return %c0_i32, %c0_i32_0 : i32, i32
  }
  func.func @transform_4(%arg0: i32) -> (i32, i32) {
    %c0_i32 = arith.constant 0 : i32
    %c0_i32_0 = arith.constant 0 : i32
    %c0_i32_1 = arith.constant 0 : i32
    return %c0_i32, %c0_i32_0 : i32, i32
  }
  func.func @transform_5(%arg0: i32) -> (i32, i32) {
    %c0_i32 = arith.constant 0 : i32
    %c0_i32_0 = arith.constant 0 : i32
    %c0_i32_1 = arith.constant 0 : i32
    return %c0_i32, %c0_i32_0 : i32, i32
  }
  func.func @transform_6(%arg0: i32) -> (i32, i32) {
    %c0_i32 = arith.constant 0 : i32
    %c0_i32_0 = arith.constant 0 : i32
    %c0_i32_1 = arith.constant 0 : i32
    return %c0_i32, %c0_i32_0 : i32, i32
  }
  func.func @transform_7(%arg0: i32) -> (i32, i32) {
    %c0_i32 = arith.constant 0 : i32
    %c0_i32_0 = arith.constant 0 : i32
    return %arg0, %c0_i32 : i32, i32
  }
}

</mosaic_0001>

<llo_original>
// kernel: _fwd.1
$region0: #{_fwd.1}
  #allocation0 [shape = 'u32[]', space=smem, size = 0x4, offset = 0x4, fixed_abs, tag = 'smem constant byte address 0x4 - core index']
  #allocation1 [shape = 'u32[144,128]{1,0:T(1,128)}', space=vmem, size = 0x12000, scoped, tag = 'internal scratch']
  %s0 = inlined_call_operand.vmem [shape: f32[8,32], index: 0, kind: input, shape index: {}]
  %s1 = inlined_call_operand.vmem [shape: bf16[32,128], index: 1, kind: input, shape index: {}]
  %s2 = inlined_call_operand.vmem [shape: f32[1,128], index: 2, kind: input, shape index: {}]
  %s3 = inlined_call_operand.hbm [shape: bf16[128,128], index: 3, kind: input, shape index: {}]
  %s4 = inlined_call_operand.vmem [shape: f32[1,128], index: 4, kind: input, shape index: {}]
  %s5 = inlined_call_operand.hbm [shape: bf16[128,128], index: 5, kind: input, shape index: {}]
  %s6 = inlined_call_operand.vmem [shape: f32[1,128], index: 6, kind: input, shape index: {}]
  %s7 = inlined_call_operand.hbm [shape: f32[8,128], index: 7, kind: output, shape index: {}]
  %s8 = sld [smem:[#allocation0]]
  $region46: #{_fwd.1} parent=0
    _
  %s10 = ssub.s32 1, %s8
  %s11 = scalar_select 0, %s10, %s8
  $region1: #{_fwd.1} parent=0
    #allocation2 [shape = 'u8[32768]{0}', space=vmem, size = 0x8000, scoped, tag = 'input window, operand 3, single buffered']
    #allocation3 [shape = 's32[1]{0}', space=sflag, size = 0x4, scoped, tag = 'scoped memory for _fwd.1']
    #allocation4 [shape = 's32[1]{0}', space=sflag, size = 0x4, scoped, tag = 'scoped memory for _fwd.1']
    #allocation5 [shape = 'u8[32768]{0}', space=vmem, size = 0x8000, scoped, tag = 'input window, operand 5, single buffered']
    #allocation6 [shape = 's32[1]{0}', space=sflag, size = 0x4, scoped, tag = 'scoped memory for _fwd.1']
    #allocation7 [shape = 'u8[4096]{0}', space=vmem, size = 0x1000, scoped, tag = 'output window, operand 0, single buffered']
    %12 = vsyncpa [#allocation3], 0
    %13 = vsyncpa [#allocation6], 0
    %14 = vsyncpa [#allocation4], 0
    // Predicated region
    $region2: #{_fwd.1} parent=1 // pred_check
      _
    $region3: #{_fwd.1} parent=1 // pred_check_branch
      %16 = sbr.rel (0) target = $region5
    $region4: #{_fwd.1} parent=1 // pred_region
      _
    $region5: #{_fwd.1} parent=1 // pred_fallthru
      _
    // Predicated region
    $region6: #{_fwd.1} parent=1 // pred_check
      _
    $region7: #{_fwd.1} parent=1 // pred_check_branch
      %18 = sbr.rel (0) target = $region9
    $region8: #{_fwd.1} parent=1 // pred_region
      _
    $region9: #{_fwd.1} parent=1 // pred_fallthru
      _
    // Predicated region
    $region10: #{_fwd.1} parent=1 // pred_check
      _
    $region11: #{_fwd.1} parent=1 // pred_check_branch
      %20 = sbr.rel (0) target = $region13
    $region12: #{_fwd.1} parent=1 // pred_region
      _
    $region13: #{_fwd.1} parent=1 // pred_fallthru
      _
    // Predicated region
    $region14: #{_fwd.1} parent=1 // pred_check
      _
    $region15: #{_fwd.1} parent=1 // pred_check_branch
      %22 = sbr.rel (0) target = $region17
    $region16: #{_fwd.1} parent=1 // pred_region
      %s24 = ssub.s32 1024, 1024
      %25 = vsyncadd [#allocation3], %s24
      %s26 = sshll.u32 [#allocation2], 4
      %s27 = int_to_ptr.vmem [resolvable:$true] %s26
      %32 = dma.hbm_to_vmem [thread:$0]  %s3, 1024, %s27, [#allocation3], 64, 64, 4
    $region17: #{_fwd.1} parent=1 // pred_fallthru
      _
    // Predicated region
    $region18: #{_fwd.1} parent=1 // pred_check
      _
    $region19: #{_fwd.1} parent=1 // pred_check_branch
      %34 = sbr.rel (0) target = $region21
    $region20: #{_fwd.1} parent=1 // pred_region
      _
    $region21: #{_fwd.1} parent=1 // pred_fallthru
      _
    // Predicated region
    $region22: #{_fwd.1} parent=1 // pred_check
      _
    $region23: #{_fwd.1} parent=1 // pred_check_branch
      %36 = sbr.rel (0) target = $region25
    $region24: #{_fwd.1} parent=1 // pred_region
      %s38 = ssub.s32 1024, 1024
      %39 = vsyncadd [#allocation6], %s38
      %s40 = sshll.u32 [#allocation5], 4
      %s41 = int_to_ptr.vmem [resolvable:$true] %s40
      %46 = dma.hbm_to_vmem [thread:$0]  %s5, 1024, %s41, [#allocation6], 64, 64, 4
    $region25: #{_fwd.1} parent=1 // pred_fallthru
      _
    // Predicated region
    $region26: #{_fwd.1} parent=1 // pred_check
      _
    $region27: #{_fwd.1} parent=1 // pred_check_branch
      %48 = sbr.rel (0) target = $region29
    $region28: #{_fwd.1} parent=1 // pred_region
      _
    $region29: #{_fwd.1} parent=1 // pred_fallthru
      _
    // Predicated region
    $region30: #{_fwd.1} parent=1 // pred_check
      _
    $region31: #{_fwd.1} parent=1 // pred_check_branch
      %50 = sbr.rel (0) target = $region33
    $region32: #{_fwd.1} parent=1 // pred_region
      %51 = dma.done [#allocation3], 1024
    $region33: #{_fwd.1} parent=1 // pred_fallthru
      _
    // Predicated region
    $region34: #{_fwd.1} parent=1 // pred_check
      _
    $region35: #{_fwd.1} parent=1 // pred_check_branch
      %53 = sbr.rel (0) target = $region37
    $region36: #{_fwd.1} parent=1 // pred_region
      %54 = dma.done [#allocation6], 1024
    $region37: #{_fwd.1} parent=1 // pred_fallthru
      _
    %v56 = vld [vmem:[%s0] sm:$0xff]
    %v57 = vpack.c.bf16 %v56, %v56
    %v58 = vld [vmem:[%s1] sm:$0xf]
    %v59 = vld [vmem:[%s1 + $0x4] sm:$0xf]
    %v60 = vld [vmem:[%s1 + $0x8] sm:$0xf]
    %v61 = vld [vmem:[%s1 + $0xc] sm:$0xf]
    %v62 = vld [vmem:[%s2] sm:$0x1]
    %v64 = vlaneseq
    %v65 = vshrl.u32 %v64, 7
    %v66 = vsub.s32 0, %v65
    %v67 = vrot.slane %v62, %v66
    %v73 = vunpack.c.l.b16 %v58
    %v74 = vunpack.c.l.b16 %v59
    %v75 = vunpack.c.l.b16 %v60
    %v76 = vunpack.c.l.b16 %v61
    %v77 = vpack.c.b16 %v74, %v73
    %v78 = vpack.c.b16 %v76, %v75
    %vm81 = vcmask 261120
    %v83 = vsel %vm81, %v57, 0
    %85 = vmatprep.subr.bf16.mxu0 0
    %86 = vmatpush1.bf16.msra.mxu0 %v77
    %87 = vmatprep.subr.bf16.mxu0 0
    %88 = vmatpush1.bf16.msra.mxu0 %v78
    %89 = vmatprep.subr.bf16.mxu0 0
    %90 = vmatpush1.bf16.msra.mxu0 0
    %91 = vmatprep.subr.bf16.mxu0 0
    %92 = vmatpush1.bf16.msra.mxu0 0
    %93 = vmatprep.subr.bf16.mxu0 0
    %94 = vmatpush1.bf16.msra.mxu0 0
    %95 = vmatprep.subr.bf16.mxu0 0
    %96 = vmatpush1.bf16.msra.mxu0 0
    %97 = vmatprep.subr.bf16.mxu0 0
    %98 = vmatpush1.bf16.msra.mxu0 0
    %99 = vmatprep.subr.bf16.mxu0 0
    %100 = vmatpush1.bf16.msra.mxu0 0
    %101 = vmatprep.subr.bf16.mxu0 0
    %102 = vmatpush1.bf16.msra.mxu0 0
    %103 = vmatprep.subr.bf16.mxu0 0
    %104 = vmatpush1.bf16.msra.mxu0 0
    %105 = vmatprep.subr.bf16.mxu0 0
    %106 = vmatpush1.bf16.msra.mxu0 0
    %107 = vmatprep.subr.bf16.mxu0 0
    %108 = vmatpush1.bf16.msra.mxu0 0
    %109 = vmatprep.subr.bf16.mxu0 0
    %110 = vmatpush1.bf16.msra.mxu0 0
    %111 = vmatprep.subr.bf16.mxu0 0
    %112 = vmatpush1.bf16.msra.mxu0 0
    %113 = vmatprep.subr.bf16.mxu0 0
    %114 = vmatpush1.bf16.msra.mxu0 0
    %115 = vmatprep.subr.bf16.mxu0 0
    %116 = vmatpush1.bf16.msra.mxu0 0
    %117 = vmatprep.mubr.bf16.mxu0 0
    %118 = vmatmul.mubr.bf16.gmra.mrb[0].mxu0 %v83
    %v119 = vpop.f32.mrb[0].mxu0
    %v120 = vadd.f32 %v67, %v119
    %v121 = vpop.f32.mrb[0].mxu0
    %v122 = vpop.f32.mrb[0].mxu0
    %v123 = vpop.f32.mrb[0].mxu0
    %124 = vdwg.mxu0
    %v125 = vsub.f32 0.0, %v120
    %v126 = vmul.f32 %v125, 1.442695
    %v127 = vpow.pop %v126
    %v128 = vadd.f32 %v127, 1.0
    %v129 = vrcp.pop %v128
    %v130 = vmul.f32 1.0, %v129
    %v131 = vpack.c.bf16 %v130, %v130
    %v132 = vld [vmem:[#allocation2] sm:$0xf]
    %v133 = vld [vmem:[#allocation2 + $0x4] sm:$0xf]
    %v134 = vld [vmem:[#allocation2 + $0x8] sm:$0xf]
    %v135 = vld [vmem:[#allocation2 + $0xc] sm:$0xf]
    %v136 = vld [vmem:[#allocation2 + $0x10] sm:$0xf]
    %v137 = vld [vmem:[#allocation2 + $0x14] sm:$0xf]
    %v138 = vld [vmem:[#allocation2 + $0x18] sm:$0xf]
    %v139 = vld [vmem:[#allocation2 + $0x1c] sm:$0xf]
    %v140 = vld [vmem:[#allocation2 + $0x20] sm:$0xf]
    %v141 = vld [vmem:[#allocation2 + $0x24] sm:$0xf]
    %v142 = vld [vmem:[#allocation2 + $0x28] sm:$0xf]
    %v143 = vld [vmem:[#allocation2 + $0x2c] sm:$0xf]
    %v144 = vld [vmem:[#allocation2 + $0x30] sm:$0xf]
    %v145 = vld [vmem:[#allocation2 + $0x34] sm:$0xf]
    %v146 = vld [vmem:[#allocation2 + $0x38] sm:$0xf]
    %v147 = vld [vmem:[#allocation2 + $0x3c] sm:$0xf]
    %v148 = vld [vmem:[%s4] sm:$0x1]
    %v150 = vlaneseq
    %v151 = vshrl.u32 %v150, 7
    %v152 = vsub.s32 0, %v151
    %v153 = vrot.slane %v148, %v152
    %v171 = vunpack.c.l.b16 %v132
    %v172 = vunpack.c.l.b16 %v133
    %v173 = vunpack.c.l.b16 %v134
    %v174 = vunpack.c.l.b16 %v135
    %v175 = vunpack.c.l.b16 %v136
    %v176 = vunpack.c.l.b16 %v137
    %v177 = vunpack.c.l.b16 %v138
    %v178 = vunpack.c.l.b16 %v139
    %v179 = vunpack.c.l.b16 %v140
    %v180 = vunpack.c.l.b16 %v141
    %v181 = vunpack.c.l.b16 %v142
    %v182 = vunpack.c.l.b16 %v143
    %v183 = vunpack.c.l.b16 %v144
    %v184 = vunpack.c.l.b16 %v145
    %v185 = vunpack.c.l.b16 %v146
    %v186 = vunpack.c.l.b16 %v147
    %v187 = vpack.c.b16 %v172, %v171
    %v188 = vpack.c.b16 %v174, %v173
    %v189 = vpack.c.b16 %v176, %v175
    %v190 = vpack.c.b16 %v178, %v177
    %v191 = vpack.c.b16 %v180, %v179
    %v192 = vpack.c.b16 %v182, %v181
    %v193 = vpack.c.b16 %v184, %v183
    %v194 = vpack.c.b16 %v186, %v185
    %203 = vmatprep.subr.bf16.mxu0 0
    %204 = vmatpush1.bf16.msra.mxu0 %v187
    %205 = vmatprep.subr.bf16.mxu0 0
    %206 = vmatpush1.bf16.msra.mxu0 %v188
    %207 = vmatprep.subr.bf16.mxu0 0
    %208 = vmatpush1.bf16.msra.mxu0 %v189
    %209 = vmatprep.subr.bf16.mxu0 0
    %210 = vmatpush1.bf16.msra.mxu0 %v190
    %211 = vmatprep.subr.bf16.mxu0 0
    %212 = vmatpush1.bf16.msra.mxu0 %v191
    %213 = vmatprep.subr.bf16.mxu0 0
    %214 = vmatpush1.bf16.msra.mxu0 %v192
    %215 = vmatprep.subr.bf16.mxu0 0
    %216 = vmatpush1.bf16.msra.mxu0 %v193
    %217 = vmatprep.subr.bf16.mxu0 0
    %218 = vmatpush1.bf16.msra.mxu0 %v194
    %219 = vmatprep.subr.bf16.mxu0 0
    %220 = vmatpush1.bf16.msra.mxu0 0
    %221 = vmatprep.subr.bf16.mxu0 0
    %222 = vmatpush1.bf16.msra.mxu0 0
    %223 = vmatprep.subr.bf16.mxu0 0
    %224 = vmatpush1.bf16.msra.mxu0 0
    %225 = vmatprep.subr.bf16.mxu0 0
    %226 = vmatpush1.bf16.msra.mxu0 0
    %227 = vmatprep.subr.bf16.mxu0 0
    %228 = vmatpush1.bf16.msra.mxu0 0
    %229 = vmatprep.subr.bf16.mxu0 0
    %230 = vmatpush1.bf16.msra.mxu0 0
    %231 = vmatprep.subr.bf16.mxu0 0
    %232 = vmatpush1.bf16.msra.mxu0 0
    %233 = vmatprep.subr.bf16.mxu0 0
    %234 = vmatpush1.bf16.msra.mxu0 0
    %235 = vmatprep.mubr.bf16.mxu0 0
    %236 = vmatmul.mubr.bf16.gmra.mrb[0].mxu0 %v131
    %v237 = vpop.f32.mrb[0].mxu0
    %v238 = vadd.f32 %v153, %v237
    %v239 = vpop.f32.mrb[0].mxu0
    %v240 = vpop.f32.mrb[0].mxu0
    %v241 = vpop.f32.mrb[0].mxu0
    %242 = vdwg.mxu0
    %v243 = vsub.f32 0.0, %v238
    %v244 = vmul.f32 %v243, 1.442695
    %v245 = vpow.pop %v244
    %v246 = vadd.f32 %v245, 1.0
    %v247 = vrcp.pop %v246
    %v248 = vmul.f32 1.0, %v247
    %v249 = vpack.c.bf16 %v248, %v248
    %v250 = vld [vmem:[#allocation5] sm:$0xf]
    %v251 = vld [vmem:[#allocation5 + $0x4] sm:$0xf]
    %v252 = vld [vmem:[#allocation5 + $0x8] sm:$0xf]
    %v253 = vld [vmem:[#allocation5 + $0xc] sm:$0xf]
    %v254 = vld [vmem:[#allocation5 + $0x10] sm:$0xf]
    %v255 = vld [vmem:[#allocation5 + $0x14] sm:$0xf]
    %v256 = vld [vmem:[#allocation5 + $0x18] sm:$0xf]
    %v257 = vld [vmem:[#allocation5 + $0x1c] sm:$0xf]
    %v258 = vld [vmem:[#allocation5 + $0x20] sm:$0xf]
    %v259 = vld [vmem:[#allocation5 + $0x24] sm:$0xf]
    %v260 = vld [vmem:[#allocation5 + $0x28] sm:$0xf]
    %v261 = vld [vmem:[#allocation5 + $0x2c] sm:$0xf]
    %v262 = vld [vmem:[#allocation5 + $0x30] sm:$0xf]
    %v263 = vld [vmem:[#allocation5 + $0x34] sm:$0xf]
    %v264 = vld [vmem:[#allocation5 + $0x38] sm:$0xf]
    %v265 = vld [vmem:[#allocation5 + $0x3c] sm:$0xf]
    %v266 = vld [vmem:[%s6] sm:$0x1]
    %v268 = vlaneseq
    %v269 = vshrl.u32 %v268, 7
    %v270 = vsub.s32 0, %v269
    %v271 = vrot.slane %v266, %v270
    %v289 = vunpack.c.l.b16 %v250
    %v290 = vunpack.c.l.b16 %v251
    %v291 = vunpack.c.l.b16 %v252
    %v292 = vunpack.c.l.b16 %v253
    %v293 = vunpack.c.l.b16 %v254
    %v294 = vunpack.c.l.b16 %v255
    %v295 = vunpack.c.l.b16 %v256
    %v296 = vunpack.c.l.b16 %v257
    %v297 = vunpack.c.l.b16 %v258
    %v298 = vunpack.c.l.b16 %v259
    %v299 = vunpack.c.l.b16 %v260
    %v300 = vunpack.c.l.b16 %v261
    %v301 = vunpack.c.l.b16 %v262
    %v302 = vunpack.c.l.b16 %v263
    %v303 = vunpack.c.l.b16 %v264
    %v304 = vunpack.c.l.b16 %v265
    %v305 = vpack.c.b16 %v290, %v289
    %v306 = vpack.c.b16 %v292, %v291
    %v307 = vpack.c.b16 %v294, %v293
    %v308 = vpack.c.b16 %v296, %v295
    %v309 = vpack.c.b16 %v298, %v297
    %v310 = vpack.c.b16 %v300, %v299
    %v311 = vpack.c.b16 %v302, %v301
    %v312 = vpack.c.b16 %v304, %v303
    %321 = vmatprep.subr.bf16.mxu0 0
    %322 = vmatpush1.bf16.msra.mxu0 %v305
    %323 = vmatprep.subr.bf16.mxu0 0
    %324 = vmatpush1.bf16.msra.mxu0 %v306
    %325 = vmatprep.subr.bf16.mxu0 0
    %326 = vmatpush1.bf16.msra.mxu0 %v307
    %327 = vmatprep.subr.bf16.mxu0 0
    %328 = vmatpush1.bf16.msra.mxu0 %v308
    %329 = vmatprep.subr.bf16.mxu0 0
    %330 = vmatpush1.bf16.msra.mxu0 %v309
    %331 = vmatprep.subr.bf16.mxu0 0
    %332 = vmatpush1.bf16.msra.mxu0 %v310
    %333 = vmatprep.subr.bf16.mxu0 0
    %334 = vmatpush1.bf16.msra.mxu0 %v311
    %335 = vmatprep.subr.bf16.mxu0 0
    %336 = vmatpush1.bf16.msra.mxu0 %v312
    %337 = vmatprep.subr.bf16.mxu0 0
    %338 = vmatpush1.bf16.msra.mxu0 0
    %339 = vmatprep.subr.bf16.mxu0 0
    %340 = vmatpush1.bf16.msra.mxu0 0
    %341 = vmatprep.subr.bf16.mxu0 0
    %342 = vmatpush1.bf16.msra.mxu0 0
    %343 = vmatprep.subr.bf16.mxu0 0
    %344 = vmatpush1.bf16.msra.mxu0 0
    %345 = vmatprep.subr.bf16.mxu0 0
    %346 = vmatpush1.bf16.msra.mxu0 0
    %347 = vmatprep.subr.bf16.mxu0 0
    %348 = vmatpush1.bf16.msra.mxu0 0
    %349 = vmatprep.subr.bf16.mxu0 0
    %350 = vmatpush1.bf16.msra.mxu0 0
    %351 = vmatprep.subr.bf16.mxu0 0
    %352 = vmatpush1.bf16.msra.mxu0 0
    %353 = vmatprep.mubr.bf16.mxu0 0
    %354 = vmatmul.mubr.bf16.gmra.mrb[0].mxu0 %v249
    %v355 = vpop.f32.mrb[0].mxu0
    %v356 = vadd.f32 %v271, %v355
    %v357 = vpop.f32.mrb[0].mxu0
    %v358 = vpop.f32.mrb[0].mxu0
    %v359 = vpop.f32.mrb[0].mxu0
    %360 = vdwg.mxu0
    %361 = vst [vmem:[#allocation7] sm:$0xff] %v356
    // Predicated region
    $region38: #{_fwd.1} parent=1 // pred_check
      _
    $region39: #{_fwd.1} parent=1 // pred_check_branch
      %363 = sbr.rel (0) target = $region41
    $region40: #{_fwd.1} parent=1 // pred_region
      %s365 = ssub.s32 128, 128
      %366 = vsyncadd [#allocation4], %s365
      %s368 = sshll.u32 [#allocation7], 4
      %s369 = int_to_ptr.vmem [resolvable:$true] %s368
      %371 = dma.vmem_to_hbm [thread:$0]  %s369, 128, %s7, [#allocation4]
    $region41: #{_fwd.1} parent=1 // pred_fallthru
      _
    // Predicated region
    $region42: #{_fwd.1} parent=1 // pred_check
      _
    $region43: #{_fwd.1} parent=1 // pred_check_branch
      %373 = sbr.rel (0) target = $region45
    $region44: #{_fwd.1} parent=1 // pred_region
      %374 = dma.done [#allocation4], 128
    $region45: #{_fwd.1} parent=1 // pred_fallthru
      _
    %375 = vsyncpa [#allocation3], 1
    %376 = vsyncpa [#allocation6], 1
    %377 = vsyncpa [#allocation4], 1

</llo_original>
